<compile_context>
chip_gen: v6e
topology: v6e:2x2x1
jax: 0.10.0
libtpu: 0.0.40
codegen_flags: <defaults>
</compile_context>

<pallas_src>
import jax
import jax.numpy as jnp
from jax.experimental import pallas as pl
from jax.experimental.pallas import tpu as pltpu


def _make_kernel(Wh, Np):
    """Kernel for one batch element.

    x_ref: [1, 4*C, F]    bf16  phase-split padded input, F = Hh*Wh + 1
    w_ref: [4, Cout, 4*C] bf16  weight groups, one per (row, col) window offset
    b_ref: [Cout, 1]      f32   bias
    o_ref: [1, Cout, Np]  f32   Np = Ho*Wh (one junk column per output row)
    """
    def kernel(x_ref, w_ref, b_ref, o_ref):
        x = x_ref[0]                                    # [4C, F]
        cout = w_ref.shape[1]
        acc = jnp.zeros((cout, Np), jnp.float32)
        for r0 in range(2):          # window row offset within a phase
            for c0 in range(2):      # window col offset within a phase
                s = r0 * Wh + c0     # flat start of the shifted window
                acc = acc + jnp.dot(w_ref[r0 * 2 + c0], x[:, s:s + Np],
                                    preferred_element_type=jnp.float32)
        o_ref[0] = (acc + b_ref[...]).astype(o_ref.dtype)
    return kernel


def downsample_forward(x_nchw, weight, bias, *, compute_dtype=jnp.bfloat16):
    """Conv2d(C, C, kernel=4, stride=2, padding=1), PyTorch semantics (NCHW in/out)."""
    B, C, H, W = x_nchw.shape
    Cout = weight.shape[0]
    # TODO(synk): odd H/W (allowed by nn.Conv2d) would need one extra zero row/col
    # before the phase split; Downsample is used with even spatial sizes.
    assert H % 2 == 0 and W % 2 == 0, "even spatial dims expected"
    Ho, Wo = H // 2, W // 2
    Hh, Wh = Ho + 1, Wo + 1          # per-phase spatial extents of the padded input
    Np = Ho * Wh                     # GEMM N (valid cols + one junk col per row)
    F = Hh * Wh + 1                  # flattened phase planes + 1 pad element

    # ---- glue: pad + pixel deinterleave (one input-sized pass, no im2col) ----
    x_pad = jnp.pad(x_nchw, ((0, 0), (0, 0), (1, 1), (1, 1)))            # [B,C,H+2,W+2]
    # x_ph[b, ph, pw, c, i, j] = x_pad[b, c, 2*i+ph, 2*j+pw]
    x_ph = x_pad.reshape(B, C, Hh, 2, Wh, 2).transpose(0, 3, 5, 1, 2, 4)
    x_flat = x_ph.reshape(B, 4 * C, Hh * Wh)
    x_flat = jnp.pad(x_flat, ((0, 0), (0, 0), (0, 1))).astype(compute_dtype)  # [B,4C,F]

    # weight [Cout, Cin, 4, 4] -> 4 window groups: [r0*2+c0, Cout, (ph*2+pw)*C + c]
    w6 = weight.reshape(Cout, C, 2, 2, 2, 2)             # [co, c, r0, ph, c0, pw]
    w_grp = (w6.transpose(2, 4, 0, 3, 5, 1)
             .reshape(4, Cout, 4 * C).astype(compute_dtype))
    b_mat = bias.reshape(Cout, 1).astype(jnp.float32)

    out_flat = pl.pallas_call(
        _make_kernel(Wh, Np),
        out_shape=jax.ShapeDtypeStruct((B, Cout, Np), jnp.float32),
        grid_spec=pltpu.PrefetchScalarGridSpec(
            num_scalar_prefetch=0,
            grid=(B,),
            in_specs=[
                pl.BlockSpec((1, 4 * C, F), lambda b: (b, 0, 0)),
                pl.BlockSpec((4, Cout, 4 * C), lambda b: (0, 0, 0)),   # VMEM-resident
                pl.BlockSpec((Cout, 1), lambda b: (0, 0)),             # VMEM-resident
            ],
            out_specs=pl.BlockSpec((1, Cout, Np), lambda b: (b, 0, 0)),
        ),
        compiler_params=pltpu.CompilerParams(
            dimension_semantics=("parallel",)),
    )(x_flat, w_grp, b_mat)

    # [B, Cout, Ho*Wh] -> [B, Cout, Ho, Wh] -> drop the junk column -> NCHW output
    out = out_flat.reshape(B, Cout, Ho, Wh)[:, :, :, :Wo]
    return out.astype(x_nchw.dtype)


def _reference_conv(x_nchw, weight, bias):
    out = jax.lax.conv_general_dilated(
        x_nchw, weight,
        window_strides=(2, 2),
        padding=((1, 1), (1, 1)),
        dimension_numbers=("NCHW", "OIHW", "NCHW"),
        precision=jax.lax.Precision.HIGHEST,
    )
    return out + bias.reshape(1, -1, 1, 1)


if __name__ == "__main__":
    key = jax.random.PRNGKey(0)
    k_x, k_w, k_b = jax.random.split(key, 3)

    B, C, H, W = 2, 4, 16, 16
    x = jax.random.normal(k_x, (B, C, H, W), dtype=jnp.float32)

    # Conv2d(channels, channels, 4, 2, 1) parameter shapes, deterministic init
    fan_in = C * 4 * 4
    bound = 1.0 / (fan_in ** 0.5)
    weight = jax.random.uniform(k_w, (C, C, 4, 4), jnp.float32, -bound, bound)
    bias = jax.random.uniform(k_b, (C,), jnp.float32, -bound, bound)

    out = jax.block_until_ready(downsample_forward(x, weight, bias))
    assert out.shape == (B, C, H // 2, W // 2), out.shape

    # exact-math check: same bf16-rounded operands, f32 accumulation
    xq = x.astype(jnp.bfloat16).astype(jnp.float32)
    wq = weight.astype(jnp.bfloat16).astype(jnp.float32)
    ref_q = _reference_conv(xq, wq, bias)
    assert jnp.allclose(out, ref_q, atol=1e-3, rtol=1e-3), "mismatch vs bf16-operand ref"

    # module-semantics check: full f32 reference, bf16-operand tolerance
    ref = _reference_conv(x, weight, bias)
    assert jnp.allclose(out, ref, atol=5e-2, rtol=5e-2), "mismatch vs f32 lax.conv ref"

    print("KERNEL_OK")
</pallas_src>

<mosaic_0001>
module attributes {stable_mosaic.version = 11 : i64} {
  func.func @kernel(%arg0: i32, %arg1: memref<1x16x82xbf16, #tpu.memory_space<vmem>>, %arg2: memref<4x4x16xbf16, #tpu.memory_space<vmem>>, %arg3: memref<4x1xf32, #tpu.memory_space<vmem>>, %arg4: memref<1x4x72xf32, #tpu.memory_space<vmem>>) attributes {dimension_semantics = [#tpu.dimension_semantics<parallel>], iteration_bounds = array<i64: 2>, scalar_prefetch = 0 : i64, scratch_operands = 0 : i64, tpu.core_type = #tpu.core_type<tc>, window_params = [{transform_indices = @transform_0, window_bounds = array<i64: 1, 16, 82>}, {pipeline_mode = #tpu.pipeline_mode<synchronous>, transform_indices = @transform_1, window_bounds = array<i64: 4, 4, 16>}, {pipeline_mode = #tpu.pipeline_mode<synchronous>, transform_indices = @transform_2, window_bounds = array<i64: 4, 1>}, {transform_indices = @transform_3, window_bounds = array<i64: 1, 4, 72>}]} {
    %c0 = arith.constant 0 : index
    %c0_0 = arith.constant 0 : index
    %c0_1 = arith.constant 0 : index
    %0 = vector.load %arg1[%c0, %c0_0, %c0_1] : memref<1x16x82xbf16, #tpu.memory_space<vmem>>, vector<1x16x82xbf16>
    %1 = vector.shape_cast %0 : vector<1x16x82xbf16> to vector<16x82xbf16>
    %cst = arith.constant 0.000000e+00 : f32
    %2 = vector.broadcast %cst : f32 to vector<4x72xf32>
    %c0_2 = arith.constant 0 : index
    %c0_3 = arith.constant 0 : index
    %c0_4 = arith.constant 0 : index
    %3 = vector.load %arg2[%c0_2, %c0_3, %c0_4] : memref<4x4x16xbf16, #tpu.memory_space<vmem>>, vector<1x4x16xbf16>
    %4 = vector.shape_cast %3 : vector<1x4x16xbf16> to vector<4x16xbf16>
    %5 = vector.extract_strided_slice %1 {offsets = [0, 0], sizes = [16, 72], strides = [1, 1]} : vector<16x82xbf16> to vector<16x72xbf16>
    %cst_5 = arith.constant dense<0.000000e+00> : vector<4x72xf32>
    %6 = tpu.matmul %4, %5, %cst_5 {dimension_numbers = #tpu.dot_dimension_numbers<[1], [0], [0], [1], [0, 0, 1, 1], [], []>} : vector<4x16xbf16>, vector<16x72xbf16>, vector<4x72xf32> -> vector<4x72xf32>
    %7 = arith.addf %2, %6 : vector<4x72xf32>
    %c1 = arith.constant 1 : index
    %c0_6 = arith.constant 0 : index
    %c0_7 = arith.constant 0 : index
    %8 = vector.load %arg2[%c1, %c0_6, %c0_7] : memref<4x4x16xbf16, #tpu.memory_space<vmem>>, vector<1x4x16xbf16>
    %9 = vector.shape_cast %8 : vector<1x4x16xbf16> to vector<4x16xbf16>
    %10 = vector.extract_strided_slice %1 {offsets = [0, 1], sizes = [16, 72], strides = [1, 1]} : vector<16x82xbf16> to vector<16x72xbf16>
    %cst_8 = arith.constant dense<0.000000e+00> : vector<4x72xf32>
    %11 = tpu.matmul %9, %10, %cst_8 {dimension_numbers = #tpu.dot_dimension_numbers<[1], [0], [0], [1], [0, 0, 1, 1], [], []>} : vector<4x16xbf16>, vector<16x72xbf16>, vector<4x72xf32> -> vector<4x72xf32>
    %12 = arith.addf %7, %11 : vector<4x72xf32>
    %c2 = arith.constant 2 : index
    %c0_9 = arith.constant 0 : index
    %c0_10 = arith.constant 0 : index
    %13 = vector.load %arg2[%c2, %c0_9, %c0_10] : memref<4x4x16xbf16, #tpu.memory_space<vmem>>, vector<1x4x16xbf16>
    %14 = vector.shape_cast %13 : vector<1x4x16xbf16> to vector<4x16xbf16>
    %15 = vector.extract_strided_slice %1 {offsets = [0, 9], sizes = [16, 72], strides = [1, 1]} : vector<16x82xbf16> to vector<16x72xbf16>
    %cst_11 = arith.constant dense<0.000000e+00> : vector<4x72xf32>
    %16 = tpu.matmul %14, %15, %cst_11 {dimension_numbers = #tpu.dot_dimension_numbers<[1], [0], [0], [1], [0, 0, 1, 1], [], []>} : vector<4x16xbf16>, vector<16x72xbf16>, vector<4x72xf32> -> vector<4x72xf32>
    %17 = arith.addf %12, %16 : vector<4x72xf32>
    %c3 = arith.constant 3 : index
    %c0_12 = arith.constant 0 : index
    %c0_13 = arith.constant 0 : index
    %18 = vector.load %arg2[%c3, %c0_12, %c0_13] : memref<4x4x16xbf16, #tpu.memory_space<vmem>>, vector<1x4x16xbf16>
    %19 = vector.shape_cast %18 : vector<1x4x16xbf16> to vector<4x16xbf16>
    %20 = vector.extract_strided_slice %1 {offsets = [0, 10], sizes = [16, 72], strides = [1, 1]} : vector<16x82xbf16> to vector<16x72xbf16>
    %cst_14 = arith.constant dense<0.000000e+00> : vector<4x72xf32>
    %21 = tpu.matmul %19, %20, %cst_14 {dimension_numbers = #tpu.dot_dimension_numbers<[1], [0], [0], [1], [0, 0, 1, 1], [], []>} : vector<4x16xbf16>, vector<16x72xbf16>, vector<4x72xf32> -> vector<4x72xf32>
    %22 = arith.addf %17, %21 : vector<4x72xf32>
    %c0_15 = arith.constant 0 : index
    %c0_16 = arith.constant 0 : index
    %23 = vector.load %arg3[%c0_15, %c0_16] : memref<4x1xf32, #tpu.memory_space<vmem>>, vector<4x1xf32>
    %24 = vector.broadcast %23 : vector<4x1xf32> to vector<4x72xf32>
    %25 = arith.addf %22, %24 : vector<4x72xf32>
    %c0_17 = arith.constant 0 : index
    %c0_18 = arith.constant 0 : index
    %c0_19 = arith.constant 0 : index
    %26 = vector.load %arg4[%c0_17, %c0_18, %c0_19] : memref<1x4x72xf32, #tpu.memory_space<vmem>>, vector<1x4x72xf32>
    %27 = vector.shape_cast %26 : vector<1x4x72xf32> to vector<4x72xf32>
    %28 = vector.shape_cast %25 : vector<4x72xf32> to vector<1x4x72xf32>
    tpu.vector_store %arg4[%c0_17, %c0_18, %c0_19], %28 {strides = array<i32>} : memref<1x4x72xf32, #tpu.memory_space<vmem>>, vector<1x4x72xf32>,
    return
  }
  func.func @transform_0(%arg0: i32) -> (i32, i32, i32) {
    %c0_i32 = arith.constant 0 : i32
    %c0_i32_0 = arith.constant 0 : i32
    %c0_i32_1 = arith.constant 0 : i32
    return %arg0, %c0_i32, %c0_i32_0 : i32, i32, i32
  }
  func.func @transform_1(%arg0: i32) -> (i32, i32, i32) {
    %c0_i32 = arith.constant 0 : i32
    %c0_i32_0 = arith.constant 0 : i32
    %c0_i32_1 = arith.constant 0 : i32
    %c0_i32_2 = arith.constant 0 : i32
    return %c0_i32, %c0_i32_0, %c0_i32_1 : i32, i32, i32
  }
  func.func @transform_2(%arg0: i32) -> (i32, i32) {
    %c0_i32 = arith.constant 0 : i32
    %c0_i32_0 = arith.constant 0 : i32
    %c0_i32_1 = arith.constant 0 : i32
    return %c0_i32, %c0_i32_0 : i32, i32
  }
  func.func @transform_3(%arg0: i32) -> (i32, i32, i32) {
    %c0_i32 = arith.constant 0 : i32
    %c0_i32_0 = arith.constant 0 : i32
    %c0_i32_1 = arith.constant 0 : i32
    return %arg0, %c0_i32, %c0_i32_0 : i32, i32, i32
  }
}

</mosaic_0001>

<llo_original>
// kernel: tpu_custom_call.1
$region0: #{tpu_custom_call.1}
  #allocation0 [shape = 'u32[]', space=smem, size = 0x4, offset = 0x4, fixed_abs, tag = 'smem constant byte address 0x4 - core index']
  #allocation1 [shape = 'u32[144,128]{1,0:T(1,128)}', space=vmem, size = 0x12000, scoped, tag = 'internal scratch']
  %s0 = inlined_call_operand.hbm [shape: bf16[2,16,82], index: 0, kind: input, shape index: {}]
  %s1 = inlined_call_operand.hbm [shape: bf16[4,4,16], index: 1, kind: input, shape index: {}]
  %s2 = inlined_call_operand.vmem [shape: f32[4,1], index: 2, kind: input, shape index: {}]
  %s3 = inlined_call_operand.hbm [shape: f32[2,4,72], index: 3, kind: output, shape index: {}]
  %s4 = sld [smem:[#allocation0]]
  $region53: #{tpu_custom_call.1} parent=0
    _
  %s6 = ssub.s32 1, %s4
  %s7 = scalar_select 0, %s6, %s4
  $region1: #{tpu_custom_call.1} parent=0
    #allocation2 [shape = 'u8[8192]{0}', space=vmem, size = 0x2000, scoped, tag = 'input window, operand 0']
    #allocation3 [shape = 's32[2]{0}', space=sflag, size = 0x8, scoped, tag = 'scoped memory for tpu_custom_call.1']
    #allocation4 [shape = 's32[2]{0}', space=sflag, size = 0x8, scoped, tag = 'scoped memory for tpu_custom_call.1']
    #allocation5 [shape = 'u8[4096]{0}', space=vmem, size = 0x1000, scoped, tag = 'input window, operand 1, single buffered']
    #allocation6 [shape = 's32[1]{0}', space=sflag, size = 0x4, scoped, tag = 'scoped memory for tpu_custom_call.1']
    #allocation7 [shape = 'u8[4096]{0}', space=vmem, size = 0x1000, scoped, tag = 'output window, operand 0']
    %8 = vsyncpa [#allocation3], 0
    %s9 = scalar_lea.sflag [#allocation3], 1
    %10 = vsyncpa %s9, 0
    %11 = vsyncpa [#allocation6], 0
    %12 = vsyncpa [#allocation4], 0
    %s13 = scalar_lea.sflag [#allocation4], 1
    %14 = vsyncpa %s13, 0
    loop: start=0, step=1, limit=4
    $region2: #{tpu_custom_call.1} parent=1 // loop_pre_header
      _
    $region3: #{tpu_custom_call.1} parent=1 // loop_header
      %s16 = sphi 0, %s20
      %p17 = scmp.ge.s32.totalorder %s16, 4
      %s26 = sphi 0, %s28
      %s29 = sphi 0, %s26
      %s30 = sphi 0, %s29
      %s46 = sphi 0, %s30
      %s50 = sphi 0, %s50
      %s52 = sphi 0, %s50
      %s53 = sphi 0, %s52
      %s67 = sphi 0, %s53
      %s71 = sphi 0, %s71
      %s73 = sphi 0, %s71
      %s74 = sphi 0, %s73
      %s88 = sphi 0, %s74
      %s94 = sphi 0, %s96
      %s97 = sphi 0, %s94
      %s98 = sphi 0, %s97
      %s114 = sphi 0, %s98
    $region4: #{tpu_custom_call.1} parent=1 // loop_header_branch
      %19 = sbr.rel (%p17) target = $region8
    $region5: #{tpu_custom_call.1} parent=1 // loop_body
      %s21 = ssub.s32 %s16, 1
      %s22 = ssub.s32 %s16, 2
      %s23 = sadd.s32 %s16, 1
      %s24 = ssub.s32 %s16, %s23
      %p25 = scmp.eq.s32.totalorder %s24, 0
      %s27 = sadd.s32 %s26, 1
      %s28 = scalar_select %p25, %s26, %s27
      %p31 = pneg %p25
      %p32 = scmp.eq.s32.totalorder %s16, 1
      %p33 = por %p31, %p32
      %p34 = scmp.ne.s32.totalorder %s26, %s29
      %p35 = scmp.eq.s32.totalorder %s16, 0
      %p36 = por %p34, %p35
      %p37 = scmp.ne.s32.totalorder %s26, %s29
      %p38 = scmp.eq.s32.totalorder %s21, 1
      %p39 = por %p37, %p38
      %p40 = scmp.ne.s32.totalorder %s29, %s30
      %p41 = scmp.eq.s32.totalorder %s21, 0
      %p42 = por %p40, %p41
      %p43 = scmp.ne.s32.totalorder %s29, %s30
      %p44 = scmp.eq.s32.totalorder %s22, 1
      %p45 = por %p43, %p44
      %p47 = scmp.ne.s32.totalorder %s30, %s46
      %p48 = scmp.eq.s32.totalorder %s22, 0
      %p49 = por %p47, %p48
      %s51 = sadd.s32 %s50, 1
      %p54 = scmp.eq.s32.totalorder %s16, 1
      %p55 = scmp.ne.s32.totalorder %s50, %s52
      %p56 = scmp.eq.s32.totalorder %s16, 0
      %p57 = por %p55, %p56
      %p58 = scmp.ne.s32.totalorder %s50, %s52
      %p59 = scmp.eq.s32.totalorder %s21, 1
      %p60 = por %p58, %p59
      %p61 = scmp.ne.s32.totalorder %s52, %s53
      %p62 = scmp.eq.s32.totalorder %s21, 0
      %p63 = por %p61, %p62
      %p64 = scmp.ne.s32.totalorder %s52, %s53
      %p65 = scmp.eq.s32.totalorder %s22, 1
      %p66 = por %p64, %p65
      %p68 = scmp.ne.s32.totalorder %s53, %s67
      %p69 = scmp.eq.s32.totalorder %s22, 0
      %p70 = por %p68, %p69
      %s72 = sadd.s32 %s71, 1
      %p75 = scmp.eq.s32.totalorder %s16, 1
      %p76 = scmp.ne.s32.totalorder %s71, %s73
      %p77 = scmp.eq.s32.totalorder %s16, 0
      %p78 = por %p76, %p77
      %p79 = scmp.ne.s32.totalorder %s71, %s73
      %p80 = scmp.eq.s32.totalorder %s21, 1
      %p81 = por %p79, %p80
      %p82 = scmp.ne.s32.totalorder %s73, %s74
      %p83 = scmp.eq.s32.totalorder %s21, 0
      %p84 = por %p82, %p83
      %p85 = scmp.ne.s32.totalorder %s73, %s74
      %p86 = scmp.eq.s32.totalorder %s22, 1
      %p87 = por %p85, %p86
      %p89 = scmp.ne.s32.totalorder %s74, %s88
      %p90 = scmp.eq.s32.totalorder %s22, 0
      %p91 = por %p89, %p90
      %s92 = ssub.s32 %s16, %s23
      %p93 = scmp.eq.s32.totalorder %s92, 0
      %s95 = sadd.s32 %s94, 1
      %s96 = scalar_select %p93, %s94, %s95
      %p99 = pneg %p93
      %p100 = scmp.eq.s32.totalorder %s16, 1
      %p101 = por %p99, %p100
      %p102 = scmp.ne.s32.totalorder %s94, %s97
      %p103 = scmp.eq.s32.totalorder %s16, 0
      %p104 = por %p102, %p103
      %p105 = scmp.ne.s32.totalorder %s94, %s97
      %p106 = scmp.eq.s32.totalorder %s21, 1
      %p107 = por %p105, %p106
      %p108 = scmp.ne.s32.totalorder %s97, %s98
      %p109 = scmp.eq.s32.totalorder %s21, 0
      %p110 = por %p108, %p109
      %p111 = scmp.ne.s32.totalorder %s97, %s98
      %p112 = scmp.eq.s32.totalorder %s22, 1
      %p113 = por %p111, %p112
      %p115 = scmp.ne.s32.totalorder %s98, %s114
      %p116 = scmp.eq.s32.totalorder %s22, 0
      %p117 = por %p115, %p116
      %p118 = scmp.le.s32.totalorder 1, %s16
      %p119 = scmp.lt.s32.totalorder %s16, 3
      %p120 = pnand %p118, %p119
      %p121 = pneg %p120
      // Predicated region
      $region9: #{tpu_custom_call.1} parent=5 // pred_check
        _
      $region10: #{tpu_custom_call.1} parent=5 // pred_check_branch
        %123 = sbr.rel (%p120) target = $region12
      $region11: #{tpu_custom_call.1} parent=5 // pred_region
        %s124 = ssub.s32 %s16, 1
        // Predicated region
        $region13: #{tpu_custom_call.1} parent=11 // pred_check
          %p125 = pneg %p63
        $region14: #{tpu_custom_call.1} parent=11 // pred_check_branch
          %127 = sbr.rel (%p125) target = $region16
        $region15: #{tpu_custom_call.1} parent=11 // pred_region
          %s129 = ssub.s32 128, 128
          %130 = vsyncadd [#allocation6], %s129
          %s131 = sshll.u32 [#allocation5], 4
          %s132 = int_to_ptr.vmem [resolvable:$true] %s131
          %137 = dma.hbm_to_vmem [thread:$0]  %s1, 128, %s132, [#allocation6], 32, 32, 2
        $region16: #{tpu_custom_call.1} parent=11 // pred_fallthru
          _
        // Predicated region
        $region17: #{tpu_custom_call.1} parent=11 // pred_check
          %p138 = pneg %p84
        $region18: #{tpu_custom_call.1} parent=11 // pred_check_branch
          %140 = sbr.rel (%p138) target = $region20
        $region19: #{tpu_custom_call.1} parent=11 // pred_region
          _
        $region20: #{tpu_custom_call.1} parent=11 // pred_fallthru
          _
      $region12: #{tpu_custom_call.1} parent=5 // pred_fallthru
        _
      %p141 = scmp.lt.s32.totalorder %s16, 2
      // Predicated region
      $region21: #{tpu_custom_call.1} parent=5 // pred_check
        %p142 = pneg %p141
      $region22: #{tpu_custom_call.1} parent=5 // pred_check_branch
        %144 = sbr.rel (%p142) target = $region24
      $region23: #{tpu_custom_call.1} parent=5 // pred_region
        // Predicated region
        $region25: #{tpu_custom_call.1} parent=23 // pred_check
          %p145 = pneg %p36
        $region26: #{tpu_custom_call.1} parent=23 // pred_check_branch
          %147 = sbr.rel (%p145) target = $region28
        $region27: #{tpu_custom_call.1} parent=23 // pred_region
          %s148 = sand.u32 %s26, 1
          %s149 = scalar_lea.sflag [#allocation3], %s148
          %s150 = sand.u32 %s26, 1
          %s151 = smul.addr %s150, 8
          %s152 = scalar_lea.vmem [#allocation2], %s151
          %s154 = ssub.s32 128, 128
          %155 = vsyncadd %s149, %s154
          %s156 = smul.addr %s16, 2
          %s157 = smul.addr %s156, 64
          %s158 = scalar_lea.hbm %s0, %s157
          %s159 = sshll.u32 %s152, 4
          %s160 = int_to_ptr.vmem [resolvable:$true] %s159
          %165 = dma.hbm_to_vmem [thread:$0]  %s158, 128, %s160, %s149, 64, 64, 4
        $region28: #{tpu_custom_call.1} parent=23 // pred_fallthru
          _
      $region24: #{tpu_custom_call.1} parent=5 // pred_fallthru
        _
      %p166 = scmp.le.s32.totalorder 1, %s16
      %p167 = scmp.lt.s32.totalorder %s16, 3
      %p168 = pnand %p166, %p167
      %p169 = pneg %p168
      // Predicated region
      $region29: #{tpu_custom_call.1} parent=5 // pred_check
        _
      $region30: #{tpu_custom_call.1} parent=5 // pred_check_branch
        %171 = sbr.rel (%p168) target = $region32
      $region31: #{tpu_custom_call.1} parent=5 // pred_region
        %s172 = ssub.s32 %s16, 1
        %s173 = sand.u32 %s29, 1
        %s174 = scalar_lea.sflag [#allocation3], %s173
        %s175 = sand.u32 %s29, 1
        %s176 = smul.addr %s175, 8
        %s177 = scalar_lea.vmem [#allocation2], %s176
        // Predicated region
        $region33: #{tpu_custom_call.1} parent=31 // pred_check
          %p178 = pneg %p42
        $region34: #{tpu_custom_call.1} parent=31 // pred_check_branch
          %180 = sbr.rel (%p178) target = $region36
        $region35: #{tpu_custom_call.1} parent=31 // pred_region
          %181 = dma.done %s174, 128
        $region36: #{tpu_custom_call.1} parent=31 // pred_fallthru
          _
        // Predicated region
        $region37: #{tpu_custom_call.1} parent=31 // pred_check
          %p182 = pneg %p63
        $region38: #{tpu_custom_call.1} parent=31 // pred_check_branch
          %184 = sbr.rel (%p182) target = $region40
        $region39: #{tpu_custom_call.1} parent=31 // pred_region
          %185 = dma.done [#allocation6], 128
        $region40: #{tpu_custom_call.1} parent=31 // pred_fallthru
          _
        %s186 = sand.u32 %s29, 1
        %s187 = scalar_lea.sflag [#allocation3], %s186
        %s188 = sand.u32 %s29, 1
        %s189 = smul.addr %s188, 8
        %s190 = scalar_lea.vmem [#allocation2], %s189
        %p191 = pneg %p42
        %p192 = pneg %p39
        %p193 = pneg %p63
        %p194 = pneg %p60
        %p195 = pneg %p84
        %p196 = pneg %p81
        %p197 = pneg %p110
        %p198 = pneg %p107
        %s199 = sand.u32 %s97, 1
        %s200 = scalar_lea.sflag [#allocation4], %s199
        %s201 = sand.u32 %s97, 1
        %s202 = smul.addr %s201, 4
        %s203 = scalar_lea.vmem [#allocation7], %s202
        %v205 = vld [vmem:[%s177] sm:$0xf]
        %v206 = vld [vmem:[%s177 + $0x4] sm:$0xf]
        %v207 = vld [vmem:[#allocation5] sm:$0x3]
        %s208 = scalar_lea.vmem [#allocation5], 2
        %v209 = vld [vmem:[%s208] sm:$0x3]
        %v212 = vunpack.c.l.b16 %v205
        %v213 = vunpack.c.l.b16 %v206
        %v214 = vpack.c.b16 %v213, %v212
        %215 = vrot.lane.b32.xlu0 %v214, 127
        %v216 = vpop.permute.xlu0 %215
        %vm218 = vcmask 130048
        %v220 = vsel %vm218, %v209, 0
        %222 = vmatprep.subr.bf16.mxu0 0
        %223 = vmatpush1.bf16.msra.mxu0 0
        %224 = vmatprep.subr.bf16.mxu0 0
        %225 = vmatpush1.bf16.msra.mxu0 0
        %226 = vmatprep.subr.bf16.mxu0 0
        %227 = vmatpush1.bf16.msra.mxu0 0
        %228 = vmatprep.subr.bf16.mxu0 0
        %229 = vmatpush1.bf16.msra.mxu0 0
        %230 = vmatprep.subr.bf16.mxu0 0
        %231 = vmatpush1.bf16.msra.mxu0 0
        %232 = vmatprep.subr.bf16.mxu0 0
        %233 = vmatpush1.bf16.msra.mxu0 0
        %234 = vmatprep.subr.bf16.mxu0 0
        %235 = vmatpush1.bf16.msra.mxu0 0
        %236 = vmatprep.subr.bf16.mxu0 0
        %237 = vmatpush1.bf16.msra.mxu0 %v216
        %238 = vmatprep.subr.bf16.mxu0 0
        %239 = vmatpush2.bf16.msra.mxu0 0
        %240 = vmatprep.subr.bf16.mxu0 0
        %241 = vmatpush2.bf16.msra.mxu0 0
        %242 = vmatprep.subr.bf16.mxu0 0
        %243 = vmatpush2.bf16.msra.mxu0 0
        %244 = vmatprep.subr.bf16.mxu0 0
        %245 = vmatpush2.bf16.msra.mxu0 0
        %246 = vmatprep.subr.bf16.mxu0 0
        %247 = vmatpush2.bf16.msra.mxu0 0
        %248 = vmatprep.subr.bf16.mxu0 0
        %249 = vmatpush2.bf16.msra.mxu0 0
        %250 = vmatprep.subr.bf16.mxu0 0
        %251 = vmatpush2.bf16.msra.mxu0 0
        %252 = vmatprep.subr.bf16.mxu0 0
        %253 = vmatpush2.bf16.msra.mxu0 0
        %254 = vmatprep.mubr.bf16.mxu0 0
        %255 = vmatmul.mubr.bf16.gmra.mxu0 %v220
        %v256 = vpop.f32.mrf.mxu0
        %v257 = vadd.f32 0.0, %v256
        %v258 = vpop.f32.mrf.mxu0
        %v259 = vpop.f32.mrf.mxu0
        %v260 = vpop.f32.mrf.mxu0
        %261 = vdwg.mxu0
        %v264 = vsel %vm218, %v207, 0
        %266 = vmatprep.subr.bf16.mxu0 0
        %267 = vmatpush1.bf16.msra.mxu0 0
        %268 = vmatprep.subr.bf16.mxu0 0
        %269 = vmatpush1.bf16.msra.mxu0 0
        %270 = vmatprep.subr.bf16.mxu0 0
        %271 = vmatpush1.bf16.msra.mxu0 0
        %272 = vmatprep.subr.bf16.mxu0 0
        %273 = vmatpush1.bf16.msra.mxu0 0
        %274 = vmatprep.subr.bf16.mxu0 0
        %275 = vmatpush1.bf16.msra.mxu0 0
        %276 = vmatprep.subr.bf16.mxu0 0
        %277 = vmatpush1.bf16.msra.mxu0 0
        %278 = vmatprep.subr.bf16.mxu0 0
        %279 = vmatpush1.bf16.msra.mxu0 0
        %280 = vmatprep.subr.bf16.mxu0 0
        %281 = vmatpush1.bf16.msra.mxu0 %v214
        %282 = vmatprep.subr.bf16.mxu0 0
        %283 = vmatpush2.bf16.msra.mxu0 0
        %284 = vmatprep.subr.bf16.mxu0 0
        %285 = vmatpush2.bf16.msra.mxu0 0
        %286 = vmatprep.subr.bf16.mxu0 0
        %287 = vmatpush2.bf16.msra.mxu0 0
        %288 = vmatprep.subr.bf16.mxu0 0
        %289 = vmatpush2.bf16.msra.mxu0 0
        %290 = vmatprep.subr.bf16.mxu0 0
        %291 = vmatpush2.bf16.msra.mxu0 0
        %292 = vmatprep.subr.bf16.mxu0 0
        %293 = vmatpush2.bf16.msra.mxu0 0
        %294 = vmatprep.subr.bf16.mxu0 0
        %295 = vmatpush2.bf16.msra.mxu0 0
        %296 = vmatprep.subr.bf16.mxu0 0
        %297 = vmatpush2.bf16.msra.mxu0 0
        %298 = vmatprep.mubr.bf16.mxu0 0
        %299 = vmatmul.mubr.bf16.gmra.mxu0 %v264
        %v300 = vpop.f32.mrf.mxu0
        %v301 = vadd.f32 %v257, %v300
        %v302 = vpop.f32.mrf.mxu0
        %v303 = vpop.f32.mrf.mxu0
        %v304 = vpop.f32.mrf.mxu0
        %305 = vdwg.mxu0
        %s306 = scalar_lea.vmem [#allocation5], 4
        %v307 = vld [vmem:[%s306] sm:$0x3]
        %308 = vrot.lane.b32.xlu0 %v214, 119
        %v309 = vpop.permute.xlu0 %308
        %v312 = vsel %vm218, %v307, 0
        %314 = vmatprep.subr.bf16.mxu0 0
        %315 = vmatpush1.bf16.msra.mxu0 0
        %316 = vmatprep.subr.bf16.mxu0 0
        %317 = vmatpush1.bf16.msra.mxu0 0
        %318 = vmatprep.subr.bf16.mxu0 0
        %319 = vmatpush1.bf16.msra.mxu0 0
        %320 = vmatprep.subr.bf16.mxu0 0
        %321 = vmatpush1.bf16.msra.mxu0 0
        %322 = vmatprep.subr.bf16.mxu0 0
        %323 = vmatpush1.bf16.msra.mxu0 0
        %324 = vmatprep.subr.bf16.mxu0 0
        %325 = vmatpush1.bf16.msra.mxu0 0
        %326 = vmatprep.subr.bf16.mxu0 0
        %327 = vmatpush1.bf16.msra.mxu0 0
        %328 = vmatprep.subr.bf16.mxu0 0
        %329 = vmatpush1.bf16.msra.mxu0 %v309
        %330 = vmatprep.subr.bf16.mxu0 0
        %331 = vmatpush2.bf16.msra.mxu0 0
        %332 = vmatprep.subr.bf16.mxu0 0
        %333 = vmatpush2.bf16.msra.mxu0 0
        %334 = vmatprep.subr.bf16.mxu0 0
        %335 = vmatpush2.bf16.msra.mxu0 0
        %336 = vmatprep.subr.bf16.mxu0 0
        %337 = vmatpush2.bf16.msra.mxu0 0
        %338 = vmatprep.subr.bf16.mxu0 0
        %339 = vmatpush2.bf16.msra.mxu0 0
        %340 = vmatprep.subr.bf16.mxu0 0
        %341 = vmatpush2.bf16.msra.mxu0 0
        %342 = vmatprep.subr.bf16.mxu0 0
        %343 = vmatpush2.bf16.msra.mxu0 0
        %344 = vmatprep.subr.bf16.mxu0 0
        %345 = vmatpush2.bf16.msra.mxu0 0
        %346 = vmatprep.mubr.bf16.mxu0 0
        %347 = vmatmul.mubr.bf16.gmra.mxu0 %v312
        %v348 = vpop.f32.mrf.mxu0
        %v349 = vadd.f32 0.0, %v348
        %v350 = vpop.f32.mrf.mxu0
        %v351 = vpop.f32.mrf.mxu0
        %v352 = vpop.f32.mrf.mxu0
        %353 = vdwg.mxu0
        %v354 = vadd.f32 %v301, %v349
        %s355 = scalar_lea.vmem [#allocation5], 6
        %v356 = vld [vmem:[%s355] sm:$0x3]
        %357 = vrot.lane.b32.xlu0 %v214, 118
        %v358 = vpop.permute.xlu0 %357
        %v361 = vsel %vm218, %v356, 0
        %363 = vmatprep.subr.bf16.mxu0 0
        %364 = vmatpush1.bf16.msra.mxu0 0
        %365 = vmatprep.subr.bf16.mxu0 0
        %366 = vmatpush1.bf16.msra.mxu0 0
        %367 = vmatprep.subr.bf16.mxu0 0
        %368 = vmatpush1.bf16.msra.mxu0 0
        %369 = vmatprep.subr.bf16.mxu0 0
        %370 = vmatpush1.bf16.msra.mxu0 0
        %371 = vmatprep.subr.bf16.mxu0 0
        %372 = vmatpush1.bf16.msra.mxu0 0
        %373 = vmatprep.subr.bf16.mxu0 0
        %374 = vmatpush1.bf16.msra.mxu0 0
        %375 = vmatprep.subr.bf16.mxu0 0
        %376 = vmatpush1.bf16.msra.mxu0 0
        %377 = vmatprep.subr.bf16.mxu0 0
        %378 = vmatpush1.bf16.msra.mxu0 %v358
        %379 = vmatprep.subr.bf16.mxu0 0
        %380 = vmatpush2.bf16.msra.mxu0 0
        %381 = vmatprep.subr.bf16.mxu0 0
        %382 = vmatpush2.bf16.msra.mxu0 0
        %383 = vmatprep.subr.bf16.mxu0 0
        %384 = vmatpush2.bf16.msra.mxu0 0
        %385 = vmatprep.subr.bf16.mxu0 0
        %386 = vmatpush2.bf16.msra.mxu0 0
        %387 = vmatprep.subr.bf16.mxu0 0
        %388 = vmatpush2.bf16.msra.mxu0 0
        %389 = vmatprep.subr.bf16.mxu0 0
        %390 = vmatpush2.bf16.msra.mxu0 0
        %391 = vmatprep.subr.bf16.mxu0 0
        %392 = vmatpush2.bf16.msra.mxu0 0
        %393 = vmatprep.subr.bf16.mxu0 0
        %394 = vmatpush2.bf16.msra.mxu0 0
        %395 = vmatprep.mubr.bf16.mxu0 0
        %396 = vmatmul.mubr.bf16.gmra.mxu0 %v361
        %v397 = vpop.f32.mrf.mxu0
        %v398 = vadd.f32 0.0, %v397
        %v399 = vpop.f32.mrf.mxu0
        %v400 = vpop.f32.mrf.mxu0
        %v401 = vpop.f32.mrf.mxu0
        %402 = vdwg.mxu0
        %v403 = vadd.f32 %v354, %v398
        %v404 = vld [vmem:[%s2] sm:$0xf]
        %406 = vset.pattern.permute.xlu0 0
        %407 = vperm.xlu0 %406, %v404
        %v408 = vpop.permute.xlu0 %407
        %v410 = vadd.f32 %v403, %v408
        %vm411 = vcmask 584704
        %412 = vst.msk [vmem:[%s203] sm:$0xf] %vm411, %v410
        %s413 = sand.u32 %s97, 1
        %s414 = scalar_lea.sflag [#allocation4], %s413
        %s415 = sand.u32 %s97, 1
        %s416 = smul.addr %s415, 4
        %s417 = scalar_lea.vmem [#allocation7], %s416
        // Predicated region
        $region41: #{tpu_custom_call.1} parent=31 // pred_check
          %p418 = pneg %p107
        $region42: #{tpu_custom_call.1} parent=31 // pred_check_branch
          %420 = sbr.rel (%p418) target = $region44
        $region43: #{tpu_custom_call.1} parent=31 // pred_region
          %s422 = ssub.s32 64, 64
          %423 = vsyncadd %s414, %s422
          %s424 = smul.addr %s21, 64
          %s425 = scalar_lea.hbm %s3, %s424
          %s427 = sshll.u32 %s417, 4
          %s428 = int_to_ptr.vmem [resolvable:$true] %s427
          %430 = dma.vmem_to_hbm [thread:$0]  %s428, 64, %s425, %s414
        $region44: #{tpu_custom_call.1} parent=31 // pred_fallthru
          _
      $region32: #{tpu_custom_call.1} parent=5 // pred_fallthru
        _
      %p431 = scmp.le.s32.totalorder 2, %s16
      // Predicated region
      $region45: #{tpu_custom_call.1} parent=5 // pred_check
        %p432 = pneg %p431
      $region46: #{tpu_custom_call.1} parent=5 // pred_check_branch
        %434 = sbr.rel (%p432) target = $region48
      $region47: #{tpu_custom_call.1} parent=5 // pred_region
        %s435 = ssub.s32 %s16, 2
        // Predicated region
        $region49: #{tpu_custom_call.1} parent=47 // pred_check
          %p436 = pneg %p113
        $region50: #{tpu_custom_call.1} parent=47 // pred_check_branch
          %438 = sbr.rel (%p436) target = $region52
        $region51: #{tpu_custom_call.1} parent=47 // pred_region
          %s439 = sand.u32 %s98, 1
          %s440 = scalar_lea.sflag [#allocation4], %s439
          %s441 = sand.u32 %s98, 1
          %s442 = smul.addr %s441, 4
          %s443 = scalar_lea.vmem [#allocation7], %s442
          %444 = dma.done %s440, 64
        $region52: #{tpu_custom_call.1} parent=47 // pred_fallthru
          _
      $region48: #{tpu_custom_call.1} parent=5 // pred_fallthru
        _
    $region6: #{tpu_custom_call.1} parent=1 // loop_footer
      %s20 = sadd.s32 1, %s16
    $region7: #{tpu_custom_call.1} parent=1 // loop_footer_branch
      %15 = sbr.rel target = $region3
    $region8: #{tpu_custom_call.1} parent=1 // loop_exit
      _
    %445 = vsyncpa [#allocation3], 1
    %s446 = scalar_lea.sflag [#allocation3], 1
    %447 = vsyncpa %s446, 1
    %448 = vsyncpa [#allocation6], 1
    %449 = vsyncpa [#allocation4], 1
    %s450 = scalar_lea.sflag [#allocation4], 1
    %451 = vsyncpa %s450, 1

</llo_original>
